<compile_context>
chip_gen: v7x
topology: tpu7x:2x2x1
jax: 0.10.0
libtpu: 0.0.40
codegen_flags: <defaults>
</compile_context>

<pallas_src>
import math
from functools import lru_cache, partial

import jax
import jax.numpy as jnp
from jax.experimental import pallas as pl
from jax.experimental.pallas import tpu as pltpu

_INV_SQRT2 = 1.0 / math.sqrt(2.0)


# --------------------------------------------------------------------------- #
# Kernels
# --------------------------------------------------------------------------- #
def _gelu(h, approximate):
    if approximate:
        # tanh-approx GELU: tanh goes to the EUP slot (nearly free vs VALU).
        c = math.sqrt(2.0 / math.pi)
        return 0.5 * h * (1.0 + jnp.tanh(c * (h + 0.044715 * (h * h * h))))
    # Exact erf GELU — matches torch.nn.GELU() default.
    return 0.5 * h * (1.0 + jax.lax.erf(h * _INV_SQRT2))


def _mlp_kernel(x_ref, w1_ref, b1_ref, w2_ref, b2_ref, o_ref, *, approx_gelu):
    """Resident-weight path: both matmuls + bias + GELU fused per M tile."""
    h = jnp.dot(x_ref[...], w1_ref[...], preferred_element_type=jnp.float32)
    h = _gelu(h + b1_ref[...], approx_gelu)                  # f32 bias + GELU
    y = jnp.dot(h.astype(w2_ref.dtype), w2_ref[...],
                preferred_element_type=jnp.float32)
    o_ref[...] = (y + b2_ref[...]).astype(o_ref.dtype)


def _mlp_kernel_htiled(x_ref, w1_ref, b1_ref, w2_ref, b2_ref, o_ref, acc_ref,
                       *, approx_gelu):
    """H-tiled path: hidden dim streamed, fc2 partial sums accumulated in VMEM."""
    hi = pl.program_id(1)

    @pl.when(hi == 0)
    def _():
        acc_ref[...] = jnp.zeros_like(acc_ref)

    h = jnp.dot(x_ref[...], w1_ref[...], preferred_element_type=jnp.float32)
    h = _gelu(h + b1_ref[...], approx_gelu)
    acc_ref[...] += jnp.dot(h.astype(w2_ref.dtype), w2_ref[...],
                            preferred_element_type=jnp.float32)

    @pl.when(hi == pl.num_programs(1) - 1)
    def _():
        o_ref[...] = (acc_ref[...] + b2_ref[...]).astype(o_ref.dtype)


# --------------------------------------------------------------------------- #
# Small helpers (all pure-Python on static shapes)
# --------------------------------------------------------------------------- #
def _round_up(n, m):
    return ((n + m - 1) // m) * m


def _pad_dim(a, axis, mult):
    pad = (-a.shape[axis]) % mult
    if pad == 0:
        return a
    widths = [(0, 0)] * a.ndim
    widths[axis] = (0, pad)
    return jnp.pad(a, widths)


def _pad_to(a, shape):
    widths = [(0, t - s) for s, t in zip(a.shape, shape)]
    if all(w == (0, 0) for w in widths):
        return a
    return jnp.pad(a, widths)


def _pick_h_tile(hp, target):
    """Largest multiple of 128 that divides hp and is <= target."""
    q = hp // 128
    best = 1
    for d in range(1, q + 1):
        if q % d == 0 and d * 128 <= max(target // 128, 1) * 128:
            best = d
    return best * 128


@lru_cache(maxsize=None)
def _vmem_budget():
    """Generation-aware VMEM budget (bytes) for the kernel."""
    phys = None
    try:
        phys = int(pltpu.get_tpu_info().vmem_capacity_bytes)
    except Exception:
        pass
    if phys is None:
        try:
            kind = jax.devices()[0].device_kind.lower()
            phys = (64 << 20) if "v7" in kind else (128 << 20)
        except Exception:
            phys = 64 << 20          # conservative fallback
    if phys <= (64 << 20):            # v7x: 64 MiB / TensorCore
        return max(phys - (8 << 20), 32 << 20)
    return min(phys - (32 << 20), 100 << 20)   # v5e / v6e: 128 MiB physical


@lru_cache(maxsize=None)
def _default_compute_dtype():
    """bf16 MXU carry by default on v7x (bf16/fp8-native, 64 MiB VMEM)."""
    try:
        kind = jax.devices()[0].device_kind.lower()
        if "v7" in kind:
            return jnp.bfloat16
    except Exception:
        pass
    return None


@lru_cache(maxsize=None)
def _single_buffer_supported():
    """One-time probe: can constant-index weights be single-buffered?"""
    if not hasattr(pl, "Buffered"):
        return False

    def _k(x_ref, w_ref, o_ref):
        o_ref[...] = x_ref[...] + w_ref[...]

    try:
        fn = pl.pallas_call(
            _k,
            out_shape=jax.ShapeDtypeStruct((16, 128), jnp.float32),
            grid_spec=pltpu.PrefetchScalarGridSpec(
                num_scalar_prefetch=0,
                grid=(2,),
                in_specs=[
                    pl.BlockSpec((8, 128), lambda i: (i, 0)),
                    pl.BlockSpec((8, 128), lambda i: (0, 0),
                                 pipeline_mode=pl.Buffered(1)),
                ],
                out_specs=pl.BlockSpec((8, 128), lambda i: (i, 0)),
            ),
        )
        jax.jit(fn).lower(jnp.zeros((16, 128), jnp.float32),
                          jnp.zeros((8, 128), jnp.float32)).compile()
        return True
    except Exception:
        return False


# --------------------------------------------------------------------------- #
# Parameter preparation (pad + cast ONCE per model, not per forward call)
# --------------------------------------------------------------------------- #
def prepare_params(params, compute_dtype=None):
    """Pad lane dims to multiples of 128 and cast W1/W2 to compute_dtype.

    Biases are kept in f32 (cheap, removes one rounding step on the bf16 path).
    Returns a dict usable by `mlp` on every forward without re-padding.
    """
    w1, b1, w2, b2 = params["w1"], params["b1"], params["w2"], params["b2"]
    wdt = compute_dtype if compute_dtype is not None else w1.dtype
    w1p = _pad_dim(_pad_dim(w1.astype(wdt), 0, 128), 1, 128)
    w2p = _pad_dim(_pad_dim(w2.astype(wdt), 0, 128), 1, 128)
    b1p = _pad_dim(b1.reshape(1, -1).astype(jnp.float32), 1, 128)
    b2p = _pad_dim(b2.reshape(1, -1).astype(jnp.float32), 1, 128)
    return dict(w1=w1p, b1=b1p, w2=w2p, b2=b2p,
                din=int(w1.shape[0]), dh=int(w1.shape[1]), dout=int(w2.shape[1]))


# --------------------------------------------------------------------------- #
# Jitted forward (all shape/config decisions are static arguments)
# --------------------------------------------------------------------------- #
@partial(jax.jit, static_argnames=("tm", "th", "dout", "single_buf",
                                   "vmem_limit", "approx_gelu"))
def _mlp_forward(x, w1p, b1p, w2p, b2p, *, tm, th, dout, single_buf,
                 vmem_limit, approx_gelu):
    orig_dtype = x.dtype
    B, N, Din = x.shape
    M = B * N
    Dp, Hp = w1p.shape
    Dop = w2p.shape[1]

    x2d = x.reshape(M, Din).astype(w1p.dtype)
    grid_m = pl.cdiv(M, tm)
    Mp = grid_m * tm
    x2d = _pad_to(x2d, (Mp, Dp))          # zero-padded rows/cols (sound: see notes)

    cparams_1d = pltpu.CompilerParams(
        dimension_semantics=("parallel",), vmem_limit_bytes=vmem_limit)
    cparams_2d = pltpu.CompilerParams(
        dimension_semantics=("parallel", "arbitrary"), vmem_limit_bytes=vmem_limit)

    if th == 0:
        # ---------------- resident-weight path ---------------- #
        def wspec(shape):
            if single_buf:
                return pl.BlockSpec(shape, lambda i: (0, 0),
                                    pipeline_mode=pl.Buffered(1))
            return pl.BlockSpec(shape, lambda i: (0, 0))

        out2d = pl.pallas_call(
            partial(_mlp_kernel, approx_gelu=approx_gelu),
            out_shape=jax.ShapeDtypeStruct((Mp, Dop), orig_dtype),
            grid_spec=pltpu.PrefetchScalarGridSpec(
                num_scalar_prefetch=0,
                grid=(grid_m,),
                in_specs=[
                    pl.BlockSpec((tm, Dp), lambda i: (i, 0)),   # x tile
                    wspec((Dp, Hp)),                            # W1 (resident)
                    wspec((1, Hp)),                             # b1
                    wspec((Hp, Dop)),                           # W2 (resident)
                    wspec((1, Dop)),                            # b2
                ],
                out_specs=pl.BlockSpec((tm, Dop), lambda i: (i, 0)),
            ),
            compiler_params=cparams_1d,
        )(x2d, w1p, b1p, w2p, b2p)
    else:
        # ---------------- H-tiled accumulator path ---------------- #
        n_h = Hp // th
        out2d = pl.pallas_call(
            partial(_mlp_kernel_htiled, approx_gelu=approx_gelu),
            out_shape=jax.ShapeDtypeStruct((Mp, Dop), orig_dtype),
            grid_spec=pltpu.PrefetchScalarGridSpec(
                num_scalar_prefetch=0,
                grid=(grid_m, n_h),
                in_specs=[
                    pl.BlockSpec((tm, Dp), lambda i, h: (i, 0)),   # x tile (resident over h)
                    pl.BlockSpec((Dp, th), lambda i, h: (0, h)),   # W1 slice
                    pl.BlockSpec((1, th), lambda i, h: (0, h)),    # b1 slice
                    pl.BlockSpec((th, Dop), lambda i, h: (h, 0)),  # W2 slice
                    pl.BlockSpec((1, Dop), lambda i, h: (0, 0)),   # b2
                ],
                out_specs=pl.BlockSpec((tm, Dop), lambda i, h: (i, 0)),
                scratch_shapes=[pltpu.VMEM((tm, Dop), jnp.float32)],
            ),
            compiler_params=cparams_2d,
        )(x2d, w1p, b1p, w2p, b2p)

    return out2d[:M, :dout].reshape(B, N, dout)


# --------------------------------------------------------------------------- #
# Public wrapper: static tiling / VMEM-budget decisions, then jitted call
# --------------------------------------------------------------------------- #
def mlp(x, params, *, tm=None, hidden_tile=None, compute_dtype=None,
        approx_gelu=False):
    """ViT MLP forward.  x: (B, N, in_features) -> (B, N, out_features).

    `params` may be raw {w1,b1,w2,b2} (padded/cast here) or the output of
    `prepare_params` (preferred: pad/cast happens once per model).
    """
    if "dout" not in params:
        if compute_dtype is None:
            compute_dtype = _default_compute_dtype()
        params = prepare_params(params, compute_dtype)
    w1p, b1p, w2p, b2p = params["w1"], params["b1"], params["w2"], params["b2"]
    dout = params["dout"]

    B, N, _ = x.shape
    M = B * N
    Dp, Hp = w1p.shape
    Dop = w2p.shape[1]
    wisz = w1p.dtype.itemsize
    row_mult = 32 // wisz                      # sublane packing: 8 (f32) / 16 (bf16)

    # -------- balanced token tiling: near-equal tiles, tiny tail waste ------
    if tm is None:
        tm = 1024 if wisz <= 2 else 512
    Mr = _round_up(max(M, 1), row_mult)
    n_m = max(pl.cdiv(Mr, tm), 2 if Mr >= 2 * row_mult else 1)  # >=2 tiles: both v7x TCs work
    tm = _round_up(pl.cdiv(Mr, n_m), row_mult)

    # -------- VMEM budget & path selection ----------------------------------
    budget = int(_vmem_budget())
    single_buf = _single_buffer_supported() if hidden_tile is None else False
    wbuf = 1 if single_buf else 2
    weight_bytes = (w1p.size + w2p.size) * wisz + (b1p.size + b2p.size) * 4

    def resident_need(tm_):
        return (wbuf * weight_bytes
                + 2 * tm_ * (Dp + Dop) * wisz       # double-buffered x / out tiles
                + tm_ * Hp * 4                      # full f32 h intermediate
                + 2 * tm_ * Dop * 4                 # f32 result temp
                + (4 << 20))                        # Mosaic internal scratch

    def htiled_need(tm_, th_):
        return (2 * (Dp * th_ + th_ * Dop) * wisz   # double-buffered W1/W2 slices
                + 2 * (th_ + Dop) * 4               # bias slices
                + 2 * tm_ * (Dp + Dop) * wisz       # x / out tiles
                + tm_ * th_ * 4                     # f32 h chunk
                + 2 * tm_ * Dop * 4                 # f32 accumulator + store temp
                + (4 << 20))

    if hidden_tile is not None:
        th = _pick_h_tile(Hp, int(hidden_tile))
    else:
        th = 0
        if resident_need(tm) > budget:
            tm_try = tm
            while tm_try > row_mult and resident_need(tm_try) > budget:
                tm_try = max(row_mult, _round_up(tm_try // 2, row_mult))
            if resident_need(tm_try) <= budget:
                tm = tm_try                          # shrink tile, weights stay resident
            else:
                th = _pick_h_tile(Hp, 512)           # weights don't fit: stream H
    if th:
        while tm > row_mult and htiled_need(tm, th) > budget:
            tm = max(row_mult, _round_up(tm // 2, row_mult))

    return _mlp_forward(x, w1p, b1p, w2p, b2p,
                        tm=int(tm), th=int(th), dout=int(dout),
                        single_buf=bool(single_buf), vmem_limit=budget,
                        approx_gelu=bool(approx_gelu))


# --------------------------------------------------------------------------- #
# Reference + init
# --------------------------------------------------------------------------- #
def _reference(x2d, p):
    """Pure-JAX reference of the same forward pass (f32, highest precision)."""
    hp = jax.lax.Precision.HIGHEST
    h = jnp.dot(x2d, p["w1"], precision=hp) + p["b1"].reshape(1, -1)
    h = 0.5 * h * (1.0 + jax.lax.erf(h * _INV_SQRT2))
    return jnp.dot(h, p["w2"], precision=hp) + p["b2"].reshape(1, -1)


def _init_params(key, in_features, hidden_features, out_features):
    """nn.Linear-style init; weights stored pre-transposed as (in, out)."""
    ks = jax.random.split(key, 4)

    def kaiming_uniform(k, fan_in, shape):
        bound = 1.0 / math.sqrt(fan_in)
        return jax.random.uniform(k, shape, jnp.float32, -bound, bound)

    w1 = kaiming_uniform(ks[0], in_features, (in_features, hidden_features))
    b1 = kaiming_uniform(ks[1], in_features, (1, hidden_features))
    w2 = kaiming_uniform(ks[2], hidden_features, (hidden_features, out_features))
    b2 = kaiming_uniform(ks[3], hidden_features, (1, out_features))
    return dict(w1=w1, b1=b1, w2=w2, b2=b2)


if __name__ == "__main__":
    key = jax.random.PRNGKey(0)
    k_x, k_p = jax.random.split(key)

    # ViT-ish small config: 197 tokens/image (non-multiple of any tile size).
    B, N = 2, 197
    in_features, hidden_features, out_features = 128, 256, 128

    x = jax.random.normal(k_x, (B, N, in_features), jnp.float32)
    params = _init_params(k_p, in_features, hidden_features, out_features)

    ref = _reference(x.reshape(B * N, in_features), params)
    ref = ref.reshape(B, N, out_features)

    # f32, resident-weight path: tight correctness check.
    prepared_f32 = prepare_params(params, jnp.float32)
    out = jax.block_until_ready(mlp(x, prepared_f32))
    assert out.shape == (B, N, out_features)
    assert jnp.allclose(out, ref, atol=1e-4, rtol=1e-4), "f32 mismatch vs reference"

    # Forced H-tiled accumulator path (the v7x big-weight variant): same numerics.
    out_ht = jax.block_until_ready(mlp(x, prepared_f32, hidden_tile=128))
    assert jnp.allclose(out_ht, ref, atol=1e-4, rtol=1e-4), "H-tiled mismatch vs reference"

    # bf16 weight/activation carry (f32 accumulate, f32 bias+GELU): loose check.
    prepared_bf16 = prepare_params(params, jnp.bfloat16)
    out_bf16 = jax.block_until_ready(mlp(x, prepared_bf16)).astype(jnp.float32)
    rel_err = jnp.linalg.norm(out_bf16 - ref) / jnp.linalg.norm(ref)
    assert float(rel_err) < 4e-2, f"bf16 relative error too large: {float(rel_err)}"

    print("KERNEL_OK")
</pallas_src>

<mosaic_0001>
module attributes {stable_mosaic.version = 11 : i64} {
  func.func @_mlp_kernel(%arg0: i32, %arg1: memref<200x128xf32, #tpu.memory_space<vmem>>, %arg2: memref<128x256xf32, #tpu.memory_space<vmem>>, %arg3: memref<1x256xf32, #tpu.memory_space<vmem>>, %arg4: memref<256x128xf32, #tpu.memory_space<vmem>>, %arg5: memref<1x128xf32, #tpu.memory_space<vmem>>, %arg6: memref<200x128xf32, #tpu.memory_space<vmem>>) attributes {dimension_semantics = [#tpu.dimension_semantics<parallel>], iteration_bounds = array<i64: 2>, scalar_prefetch = 0 : i64, scratch_operands = 0 : i64, tpu.core_type = #tpu.core_type<tc>, window_params = [{transform_indices = @transform_0, window_bounds = array<i64: 200, 128>}, {pipeline_mode = #tpu.pipeline_mode<synchronous>, transform_indices = @transform_1, window_bounds = array<i64: 128, 256>}, {pipeline_mode = #tpu.pipeline_mode<synchronous>, transform_indices = @transform_2, window_bounds = array<i64: 1, 256>}, {pipeline_mode = #tpu.pipeline_mode<synchronous>, transform_indices = @transform_3, window_bounds = array<i64: 256, 128>}, {pipeline_mode = #tpu.pipeline_mode<synchronous>, transform_indices = @transform_4, window_bounds = array<i64: 1, 128>}, {transform_indices = @transform_5, window_bounds = array<i64: 200, 128>}]} {
    %c0 = arith.constant 0 : index
    %c0_0 = arith.constant 0 : index
    %0 = vector.load %arg1[%c0, %c0_0] : memref<200x128xf32, #tpu.memory_space<vmem>>, vector<200x128xf32>
    %c0_1 = arith.constant 0 : index
    %c0_2 = arith.constant 0 : index
    %1 = vector.load %arg2[%c0_1, %c0_2] : memref<128x256xf32, #tpu.memory_space<vmem>>, vector<128x256xf32>
    %cst = arith.constant dense<0.000000e+00> : vector<200x256xf32>
    %2 = tpu.matmul %0, %1, %cst {dimension_numbers = #tpu.dot_dimension_numbers<[1], [0], [0], [1], [0, 0, 1, 1], [], []>} : vector<200x128xf32>, vector<128x256xf32>, vector<200x256xf32> -> vector<200x256xf32>
    %c0_3 = arith.constant 0 : index
    %c0_4 = arith.constant 0 : index
    %3 = vector.load %arg3[%c0_3, %c0_4] : memref<1x256xf32, #tpu.memory_space<vmem>>, vector<1x256xf32>
    %4 = vector.broadcast %3 : vector<1x256xf32> to vector<200x256xf32>
    %5 = arith.addf %2, %4 : vector<200x256xf32>
    %cst_5 = arith.constant 5.000000e-01 : f32
    %6 = vector.broadcast %cst_5 : f32 to vector<200x256xf32>
    %7 = arith.mulf %6, %5 : vector<200x256xf32>
    %cst_6 = arith.constant 0.707106769 : f32
    %8 = vector.broadcast %cst_6 : f32 to vector<200x256xf32>
    %9 = arith.mulf %5, %8 : vector<200x256xf32>
    %10 = math.erf %9 : vector<200x256xf32>
    %cst_7 = arith.constant 1.000000e+00 : f32
    %11 = vector.broadcast %cst_7 : f32 to vector<200x256xf32>
    %12 = arith.addf %11, %10 : vector<200x256xf32>
    %13 = arith.mulf %7, %12 : vector<200x256xf32>
    %c0_8 = arith.constant 0 : index
    %c0_9 = arith.constant 0 : index
    %14 = vector.load %arg4[%c0_8, %c0_9] : memref<256x128xf32, #tpu.memory_space<vmem>>, vector<256x128xf32>
    %cst_10 = arith.constant dense<0.000000e+00> : vector<200x128xf32>
    %15 = tpu.matmul %13, %14, %cst_10 {dimension_numbers = #tpu.dot_dimension_numbers<[1], [0], [0], [1], [0, 0, 1, 1], [], []>} : vector<200x256xf32>, vector<256x128xf32>, vector<200x128xf32> -> vector<200x128xf32>
    %c0_11 = arith.constant 0 : index
    %c0_12 = arith.constant 0 : index
    %16 = vector.load %arg5[%c0_11, %c0_12] : memref<1x128xf32, #tpu.memory_space<vmem>>, vector<1x128xf32>
    %17 = vector.broadcast %16 : vector<1x128xf32> to vector<200x128xf32>
    %18 = arith.addf %15, %17 : vector<200x128xf32>
    %c0_13 = arith.constant 0 : index
    %c0_14 = arith.constant 0 : index
    %19 = vector.load %arg6[%c0_13, %c0_14] : memref<200x128xf32, #tpu.memory_space<vmem>>, vector<200x128xf32>
    tpu.vector_store %arg6[%c0_13, %c0_14], %18 {strides = array<i32>} : memref<200x128xf32, #tpu.memory_space<vmem>>, vector<200x128xf32>,
    return
  }
  func.func @transform_0(%arg0: i32) -> (i32, i32) {
    %c0_i32 = arith.constant 0 : i32
    %c0_i32_0 = arith.constant 0 : i32
    return %arg0, %c0_i32 : i32, i32
  }
  func.func @transform_1(%arg0: i32) -> (i32, i32) {
    %c0_i32 = arith.constant 0 : i32
    %c0_i32_0 = arith.constant 0 : i32
    %c0_i32_1 = arith.constant 0 : i32
    return %c0_i32, %c0_i32_0 : i32, i32
  }
  func.func @transform_2(%arg0: i32) -> (i32, i32) {
    %c0_i32 = arith.constant 0 : i32
    %c0_i32_0 = arith.constant 0 : i32
    %c0_i32_1 = arith.constant 0 : i32
    return %c0_i32, %c0_i32_0 : i32, i32
  }
  func.func @transform_3(%arg0: i32) -> (i32, i32) {
    %c0_i32 = arith.constant 0 : i32
    %c0_i32_0 = arith.constant 0 : i32
    %c0_i32_1 = arith.constant 0 : i32
    return %c0_i32, %c0_i32_0 : i32, i32
  }
  func.func @transform_4(%arg0: i32) -> (i32, i32) {
    %c0_i32 = arith.constant 0 : i32
    %c0_i32_0 = arith.constant 0 : i32
    %c0_i32_1 = arith.constant 0 : i32
    return %c0_i32, %c0_i32_0 : i32, i32
  }
  func.func @transform_5(%arg0: i32) -> (i32, i32) {
    %c0_i32 = arith.constant 0 : i32
    %c0_i32_0 = arith.constant 0 : i32
    return %arg0, %c0_i32 : i32, i32
  }
}

</mosaic_0001>

<llo_original>
// kernel: _mlp_forward.1
$region0: #{_mlp_forward.1}
  #allocation0 [shape = 'u32[]', space=smem, size = 0x4, offset = 0x4, fixed_abs, tag = 'smem constant byte address 0x4 - core index']
  #allocation1 [shape = 'u32[144,128]{1,0:T(1,128)}', space=vmem, size = 0x12000, scoped, tag = 'internal scratch']
  %s0 = inlined_call_operand.hbm [shape: f32[400,128], index: 0, kind: input, shape index: {}]
  %s1 = inlined_call_operand.hbm [shape: f32[128,256], index: 1, kind: input, shape index: {}]
  %s2 = inlined_call_operand.hbm [shape: f32[1,256], index: 2, kind: input, shape index: {}]
  %s3 = inlined_call_operand.hbm [shape: f32[256,128], index: 3, kind: input, shape index: {}]
  %s4 = inlined_call_operand.hbm [shape: f32[1,128], index: 4, kind: input, shape index: {}]
  %s5 = inlined_call_operand.hbm [shape: f32[400,128], index: 5, kind: output, shape index: {}]
  %s6 = sld [smem:[#allocation0]]
  $region73: #{_mlp_forward.1} parent=0
    _
  %s8 = ssub.s32 1, %s6
  %s9 = scalar_select 0, %s8, %s6
  $region1: #{_mlp_forward.1} parent=0
    #allocation2 [shape = 'u8[204800]{0}', space=vmem, size = 0x32000, scoped, tag = 'input window, operand 0']
    #allocation3 [shape = 's32[2]{0}', space=sflag, size = 0x8, scoped, tag = 'scoped memory for _mlp_forward.1']
    #allocation4 [shape = 's32[2]{0}', space=sflag, size = 0x8, scoped, tag = 'scoped memory for _mlp_forward.1']
    #allocation5 [shape = 'u8[131072]{0}', space=vmem, size = 0x20000, scoped, tag = 'input window, operand 1, single buffered']
    #allocation6 [shape = 's32[1]{0}', space=sflag, size = 0x4, scoped, tag = 'scoped memory for _mlp_forward.1']
    #allocation7 [shape = 'u8[1024]{0}', space=vmem, size = 0x400, scoped, tag = 'input window, operand 2, single buffered']
    #allocation8 [shape = 'u8[131072]{0}', space=vmem, size = 0x20000, scoped, tag = 'input window, operand 3, single buffered']
    #allocation9 [shape = 's32[1]{0}', space=sflag, size = 0x4, scoped, tag = 'scoped memory for _mlp_forward.1']
    #allocation10 [shape = 'u8[512]{0}', space=vmem, size = 0x400, scoped, tag = 'input window, operand 4, single buffered']
    #allocation11 [shape = 'u8[204800]{0}', space=vmem, size = 0x32000, scoped, tag = 'output window, operand 0']
    %10 = vsyncpa [#allocation3], 0
    %s11 = scalar_lea.sflag [#allocation3], 1
    %12 = vsyncpa %s11, 0
    %13 = vsyncpa [#allocation6], 0
    %14 = vsyncpa [#allocation9], 0
    %15 = vsyncpa [#allocation4], 0
    %s16 = scalar_lea.sflag [#allocation4], 1
    %17 = vsyncpa %s16, 0
    loop: start=0, step=1, limit=4
    $region2: #{_mlp_forward.1} parent=1 // loop_pre_header
      _
    $region3: #{_mlp_forward.1} parent=1 // loop_header
      %s19 = sphi 0, %s23
      %p20 = scmp.ge.s32.totalorder %s19, 4
      %s29 = sphi 0, %s31
      %s32 = sphi 0, %s29
      %s33 = sphi 0, %s32
      %s49 = sphi 0, %s33
      %s53 = sphi 0, %s53
      %s55 = sphi 0, %s53
      %s56 = sphi 0, %s55
      %s70 = sphi 0, %s56
      %s74 = sphi 0, %s74
      %s76 = sphi 0, %s74
      %s77 = sphi 0, %s76
      %s91 = sphi 0, %s77
      %s95 = sphi 0, %s95
      %s97 = sphi 0, %s95
      %s98 = sphi 0, %s97
      %s112 = sphi 0, %s98
      %s116 = sphi 0, %s116
      %s118 = sphi 0, %s116
      %s119 = sphi 0, %s118
      %s133 = sphi 0, %s119
      %s139 = sphi 0, %s141
      %s142 = sphi 0, %s139
      %s143 = sphi 0, %s142
      %s159 = sphi 0, %s143
    $region4: #{_mlp_forward.1} parent=1 // loop_header_branch
      %22 = sbr.rel (%p20) target = $region8
    $region5: #{_mlp_forward.1} parent=1 // loop_body
      %s24 = ssub.s32 %s19, 1
      %s25 = ssub.s32 %s19, 2
      %s26 = sadd.s32 %s19, 1
      %s27 = ssub.s32 %s19, %s26
      %p28 = scmp.eq.s32.totalorder %s27, 0
      %s30 = sadd.s32 %s29, 1
      %s31 = scalar_select %p28, %s29, %s30
      %p34 = pneg %p28
      %p35 = scmp.eq.s32.totalorder %s19, 1
      %p36 = por %p34, %p35
      %p37 = scmp.ne.s32.totalorder %s29, %s32
      %p38 = scmp.eq.s32.totalorder %s19, 0
      %p39 = por %p37, %p38
      %p40 = scmp.ne.s32.totalorder %s29, %s32
      %p41 = scmp.eq.s32.totalorder %s24, 1
      %p42 = por %p40, %p41
      %p43 = scmp.ne.s32.totalorder %s32, %s33
      %p44 = scmp.eq.s32.totalorder %s24, 0
      %p45 = por %p43, %p44
      %p46 = scmp.ne.s32.totalorder %s32, %s33
      %p47 = scmp.eq.s32.totalorder %s25, 1
      %p48 = por %p46, %p47
      %p50 = scmp.ne.s32.totalorder %s33, %s49
      %p51 = scmp.eq.s32.totalorder %s25, 0
      %p52 = por %p50, %p51
      %s54 = sadd.s32 %s53, 1
      %p57 = scmp.eq.s32.totalorder %s19, 1
      %p58 = scmp.ne.s32.totalorder %s53, %s55
      %p59 = scmp.eq.s32.totalorder %s19, 0
      %p60 = por %p58, %p59
      %p61 = scmp.ne.s32.totalorder %s53, %s55
      %p62 = scmp.eq.s32.totalorder %s24, 1
      %p63 = por %p61, %p62
      %p64 = scmp.ne.s32.totalorder %s55, %s56
      %p65 = scmp.eq.s32.totalorder %s24, 0
      %p66 = por %p64, %p65
      %p67 = scmp.ne.s32.totalorder %s55, %s56
      %p68 = scmp.eq.s32.totalorder %s25, 1
      %p69 = por %p67, %p68
      %p71 = scmp.ne.s32.totalorder %s56, %s70
      %p72 = scmp.eq.s32.totalorder %s25, 0
      %p73 = por %p71, %p72
      %s75 = sadd.s32 %s74, 1
      %p78 = scmp.eq.s32.totalorder %s19, 1
      %p79 = scmp.ne.s32.totalorder %s74, %s76
      %p80 = scmp.eq.s32.totalorder %s19, 0
      %p81 = por %p79, %p80
      %p82 = scmp.ne.s32.totalorder %s74, %s76
      %p83 = scmp.eq.s32.totalorder %s24, 1
      %p84 = por %p82, %p83
      %p85 = scmp.ne.s32.totalorder %s76, %s77
      %p86 = scmp.eq.s32.totalorder %s24, 0
      %p87 = por %p85, %p86
      %p88 = scmp.ne.s32.totalorder %s76, %s77
      %p89 = scmp.eq.s32.totalorder %s25, 1
      %p90 = por %p88, %p89
      %p92 = scmp.ne.s32.totalorder %s77, %s91
      %p93 = scmp.eq.s32.totalorder %s25, 0
      %p94 = por %p92, %p93
      %s96 = sadd.s32 %s95, 1
      %p99 = scmp.eq.s32.totalorder %s19, 1
      %p100 = scmp.ne.s32.totalorder %s95, %s97
      %p101 = scmp.eq.s32.totalorder %s19, 0
      %p102 = por %p100, %p101
      %p103 = scmp.ne.s32.totalorder %s95, %s97
      %p104 = scmp.eq.s32.totalorder %s24, 1
      %p105 = por %p103, %p104
      %p106 = scmp.ne.s32.totalorder %s97, %s98
      %p107 = scmp.eq.s32.totalorder %s24, 0
      %p108 = por %p106, %p107
      %p109 = scmp.ne.s32.totalorder %s97, %s98
      %p110 = scmp.eq.s32.totalorder %s25, 1
      %p111 = por %p109, %p110
      %p113 = scmp.ne.s32.totalorder %s98, %s112
      %p114 = scmp.eq.s32.totalorder %s25, 0
      %p115 = por %p113, %p114
      %s117 = sadd.s32 %s116, 1
      %p120 = scmp.eq.s32.totalorder %s19, 1
      %p121 = scmp.ne.s32.totalorder %s116, %s118
      %p122 = scmp.eq.s32.totalorder %s19, 0
      %p123 = por %p121, %p122
      %p124 = scmp.ne.s32.totalorder %s116, %s118
      %p125 = scmp.eq.s32.totalorder %s24, 1
      %p126 = por %p124, %p125
      %p127 = scmp.ne.s32.totalorder %s118, %s119
      %p128 = scmp.eq.s32.totalorder %s24, 0
      %p129 = por %p127, %p128
      %p130 = scmp.ne.s32.totalorder %s118, %s119
      %p131 = scmp.eq.s32.totalorder %s25, 1
      %p132 = por %p130, %p131
      %p134 = scmp.ne.s32.totalorder %s119, %s133
      %p135 = scmp.eq.s32.totalorder %s25, 0
      %p136 = por %p134, %p135
      %s137 = ssub.s32 %s19, %s26
      %p138 = scmp.eq.s32.totalorder %s137, 0
      %s140 = sadd.s32 %s139, 1
      %s141 = scalar_select %p138, %s139, %s140
      %p144 = pneg %p138
      %p145 = scmp.eq.s32.totalorder %s19, 1
      %p146 = por %p144, %p145
      %p147 = scmp.ne.s32.totalorder %s139, %s142
      %p148 = scmp.eq.s32.totalorder %s19, 0
      %p149 = por %p147, %p148
      %p150 = scmp.ne.s32.totalorder %s139, %s142
      %p151 = scmp.eq.s32.totalorder %s24, 1
      %p152 = por %p150, %p151
      %p153 = scmp.ne.s32.totalorder %s142, %s143
      %p154 = scmp.eq.s32.totalorder %s24, 0
      %p155 = por %p153, %p154
      %p156 = scmp.ne.s32.totalorder %s142, %s143
      %p157 = scmp.eq.s32.totalorder %s25, 1
      %p158 = por %p156, %p157
      %p160 = scmp.ne.s32.totalorder %s143, %s159
      %p161 = scmp.eq.s32.totalorder %s25, 0
      %p162 = por %p160, %p161
      %p163 = scmp.le.s32.totalorder 1, %s19
      %p164 = scmp.lt.s32.totalorder %s19, 3
      %p165 = pnand %p163, %p164
      %p166 = pneg %p165
      // Predicated region
      $region9: #{_mlp_forward.1} parent=5 // pred_check
        _
      $region10: #{_mlp_forward.1} parent=5 // pred_check_branch
        %168 = sbr.rel (%p165) target = $region12
      $region11: #{_mlp_forward.1} parent=5 // pred_region
        %s169 = ssub.s32 %s19, 1
        // Predicated region
        $region13: #{_mlp_forward.1} parent=11 // pred_check
          %p170 = pneg %p66
        $region14: #{_mlp_forward.1} parent=11 // pred_check_branch
          %172 = sbr.rel (%p170) target = $region16
        $region15: #{_mlp_forward.1} parent=11 // pred_region
          %s174 = ssub.s32 4096, 4096
          %175 = vsyncadd [#allocation6], %s174
          %s176 = sshll.u32 [#allocation5], 4
          %s177 = int_to_ptr.vmem [resolvable:$true] %s176
          %182 = dma.hbm_to_vmem [thread:$0]  %s1, 4096, %s177, [#allocation6], 256, 256, 16
        $region16: #{_mlp_forward.1} parent=11 // pred_fallthru
          _
        // Predicated region
        $region17: #{_mlp_forward.1} parent=11 // pred_check
          %p183 = pneg %p87
        $region18: #{_mlp_forward.1} parent=11 // pred_check_branch
          %185 = sbr.rel (%p183) target = $region20
        $region19: #{_mlp_forward.1} parent=11 // pred_region
          %s187 = ssub.s32 32, 32
          %188 = vsyncadd [#allocation6], %s187
          %s190 = sshll.u32 [#allocation7], 4
          %s191 = int_to_ptr.vmem [resolvable:$true] %s190
          %193 = dma.hbm_to_vmem [thread:$0]  %s2, 32, %s191, [#allocation6]
        $region20: #{_mlp_forward.1} parent=11 // pred_fallthru
          _
        // Predicated region
        $region21: #{_mlp_forward.1} parent=11 // pred_check
          %p194 = pneg %p108
        $region22: #{_mlp_forward.1} parent=11 // pred_check_branch
          %196 = sbr.rel (%p194) target = $region24
        $region23: #{_mlp_forward.1} parent=11 // pred_region
          %s198 = ssub.s32 4096, 4096
          %199 = vsyncadd [#allocation9], %s198
          %s200 = sshll.u32 [#allocation8], 4
          %s201 = int_to_ptr.vmem [resolvable:$true] %s200
          %206 = dma.hbm_to_vmem [thread:$0]  %s3, 4096, %s201, [#allocation9], 128, 128, 8
        $region24: #{_mlp_forward.1} parent=11 // pred_fallthru
          _
        // Predicated region
        $region25: #{_mlp_forward.1} parent=11 // pred_check
          %p207 = pneg %p129
        $region26: #{_mlp_forward.1} parent=11 // pred_check_branch
          %209 = sbr.rel (%p207) target = $region28
        $region27: #{_mlp_forward.1} parent=11 // pred_region
          %s211 = ssub.s32 16, 16
          %212 = vsyncadd [#allocation9], %s211
          %s214 = sshll.u32 [#allocation10], 4
          %s215 = int_to_ptr.vmem [resolvable:$true] %s214
          %217 = dma.hbm_to_vmem [thread:$0]  %s4, 16, %s215, [#allocation9]
        $region28: #{_mlp_forward.1} parent=11 // pred_fallthru
          _
      $region12: #{_mlp_forward.1} parent=5 // pred_fallthru
        _
      %p218 = scmp.lt.s32.totalorder %s19, 2
      // Predicated region
      $region29: #{_mlp_forward.1} parent=5 // pred_check
        %p219 = pneg %p218
      $region30: #{_mlp_forward.1} parent=5 // pred_check_branch
        %221 = sbr.rel (%p219) target = $region32
      $region31: #{_mlp_forward.1} parent=5 // pred_region
        // Predicated region
        $region33: #{_mlp_forward.1} parent=31 // pred_check
          %p222 = pneg %p39
        $region34: #{_mlp_forward.1} parent=31 // pred_check_branch
          %224 = sbr.rel (%p222) target = $region36
        $region35: #{_mlp_forward.1} parent=31 // pred_region
          %s225 = sand.u32 %s29, 1
          %s226 = scalar_lea.sflag [#allocation3], %s225
          %s227 = sand.u32 %s29, 1
          %s228 = smul.addr %s227, 200
          %s229 = scalar_lea.vmem [#allocation2], %s228
          %s230 = smul.u32 25, %s19
          %s232 = ssub.s32 3200, 3200
          %233 = vsyncadd %s226, %s232
          %s234 = smul.addr %s230, 128
          %s235 = scalar_lea.hbm %s0, %s234
          %s236 = sshll.u32 %s229, 4
          %s237 = int_to_ptr.vmem [resolvable:$true] %s236
          %242 = dma.hbm_to_vmem [thread:$0]  %s235, 3200, %s237, %s226, 128, 128, 8
        $region36: #{_mlp_forward.1} parent=31 // pred_fallthru
          _
      $region32: #{_mlp_forward.1} parent=5 // pred_fallthru
        _
      %p243 = scmp.le.s32.totalorder 1, %s19
      %p244 = scmp.lt.s32.totalorder %s19, 3
      %p245 = pnand %p243, %p244
      %p246 = pneg %p245
      // Predicated region
      $region37: #{_mlp_forward.1} parent=5 // pred_check
        _
      $region38: #{_mlp_forward.1} parent=5 // pred_check_branch
        %248 = sbr.rel (%p245) target = $region40
      $region39: #{_mlp_forward.1} parent=5 // pred_region
        %s249 = ssub.s32 %s19, 1
        %s250 = sand.u32 %s32, 1
        %s251 = scalar_lea.sflag [#allocation3], %s250
        %s252 = sand.u32 %s32, 1
        %s253 = smul.addr %s252, 200
        %s254 = scalar_lea.vmem [#allocation2], %s253
        // Predicated region
        $region41: #{_mlp_forward.1} parent=39 // pred_check
          %p255 = pneg %p45
        $region42: #{_mlp_forward.1} parent=39 // pred_check_branch
          %257 = sbr.rel (%p255) target = $region44
        $region43: #{_mlp_forward.1} parent=39 // pred_region
          %258 = dma.done %s251, 3200
        $region44: #{_mlp_forward.1} parent=39 // pred_fallthru
          _
        // Predicated region
        $region45: #{_mlp_forward.1} parent=39 // pred_check
          %p259 = pneg %p66
        $region46: #{_mlp_forward.1} parent=39 // pred_check_branch
          %261 = sbr.rel (%p259) target = $region48
        $region47: #{_mlp_forward.1} parent=39 // pred_region
          %262 = dma.done [#allocation6], 4096
        $region48: #{_mlp_forward.1} parent=39 // pred_fallthru
          _
        // Predicated region
        $region49: #{_mlp_forward.1} parent=39 // pred_check
          %p263 = pneg %p87
        $region50: #{_mlp_forward.1} parent=39 // pred_check_branch
          %265 = sbr.rel (%p263) target = $region52
        $region51: #{_mlp_forward.1} parent=39 // pred_region
          %266 = dma.done [#allocation6], 32
        $region52: #{_mlp_forward.1} parent=39 // pred_fallthru
          _
        // Predicated region
        $region53: #{_mlp_forward.1} parent=39 // pred_check
          %p267 = pneg %p108
        $region54: #{_mlp_forward.1} parent=39 // pred_check_branch
          %269 = sbr.rel (%p267) target = $region56
        $region55: #{_mlp_forward.1} parent=39 // pred_region
          %270 = dma.done [#allocation9], 4096
        $region56: #{_mlp_forward.1} parent=39 // pred_fallthru
          _
        // Predicated region
        $region57: #{_mlp_forward.1} parent=39 // pred_check
          %p271 = pneg %p129
        $region58: #{_mlp_forward.1} parent=39 // pred_check_branch
          %273 = sbr.rel (%p271) target = $region60
        $region59: #{_mlp_forward.1} parent=39 // pred_region
          %274 = dma.done [#allocation9], 16
        $region60: #{_mlp_forward.1} parent=39 // pred_fallthru
          _
        %s275 = sand.u32 %s32, 1
        %s276 = scalar_lea.sflag [#allocation3], %s275
        %s277 = sand.u32 %s32, 1
        %s278 = smul.addr %s277, 200
        %s279 = scalar_lea.vmem [#allocation2], %s278
        %p280 = pneg %p45
        %p281 = pneg %p42
        %p282 = pneg %p66
        %p283 = pneg %p63
        %p284 = pneg %p87
        %p285 = pneg %p84
        %p286 = pneg %p108
        %p287 = pneg %p105
        %p288 = pneg %p129
        %p289 = pneg %p126
        %p290 = pneg %p155
        %p291 = pneg %p152
        %s292 = sand.u32 %s142, 1
        %s293 = scalar_lea.sflag [#allocation4], %s292
        %s294 = sand.u32 %s142, 1
        %s295 = smul.addr %s294, 200
        %s296 = scalar_lea.vmem [#allocation11], %s295
        %s297 = smul.u32 25, %s24
        %s298 = smul.u32 25, %s24
        %v299 = vld [vmem:[%s254] sm:$0xff]
        %v300 = vld [vmem:[%s254 + $0x8] sm:$0xff]
        %v301 = vld [vmem:[%s254 + $0x10] sm:$0xff]
        %v302 = vld [vmem:[%s254 + $0x18] sm:$0xff]
        %v303 = vld [vmem:[%s254 + $0x20] sm:$0xff]
        %v304 = vld [vmem:[%s254 + $0x28] sm:$0xff]
        %v305 = vld [vmem:[%s254 + $0x30] sm:$0xff]
        %v306 = vld [vmem:[%s254 + $0x38] sm:$0xff]
        %v307 = vld [vmem:[%s254 + $0x40] sm:$0xff]
        %v308 = vld [vmem:[%s254 + $0x48] sm:$0xff]
        %v309 = vld [vmem:[%s254 + $0x50] sm:$0xff]
        %v310 = vld [vmem:[%s254 + $0x58] sm:$0xff]
        %v311 = vld [vmem:[%s254 + $0x60] sm:$0xff]
        %v312 = vld [vmem:[%s254 + $0x68] sm:$0xff]
        %v313 = vld [vmem:[%s254 + $0x70] sm:$0xff]
        %v314 = vld [vmem:[%s254 + $0x78] sm:$0xff]
        %v315 = vld [vmem:[%s254 + $0x80] sm:$0xff]
        %v316 = vld [vmem:[%s254 + $0x88] sm:$0xff]
        %v317 = vld [vmem:[%s254 + $0x90] sm:$0xff]
        %v318 = vld [vmem:[%s254 + $0x98] sm:$0xff]
        %v319 = vld [vmem:[%s254 + $0xa0] sm:$0xff]
        %v320 = vld [vmem:[%s254 + $0xa8] sm:$0xff]
        %v321 = vld [vmem:[%s254 + $0xb0] sm:$0xff]
        %v322 = vld [vmem:[%s254 + $0xb8] sm:$0xff]
        %v323 = vld [vmem:[%s254 + $0xc0] sm:$0xff]
        %v324 = vld [vmem:[#allocation5] sm:$0xff]
        %v325 = vld [vmem:[#allocation5 + $0x8] sm:$0xff]
        %v326 = vld [vmem:[#allocation5 + $0x10] sm:$0xff]
        %v327 = vld [vmem:[#allocation5 + $0x18] sm:$0xff]
        %v328 = vld [vmem:[#allocation5 + $0x20] sm:$0xff]
        %v329 = vld [vmem:[#allocation5 + $0x28] sm:$0xff]
        %v330 = vld [vmem:[#allocation5 + $0x30] sm:$0xff]
        %v331 = vld [vmem:[#allocation5 + $0x38] sm:$0xff]
        %v332 = vld [vmem:[#allocation5 + $0x40] sm:$0xff]
        %v333 = vld [vmem:[#allocation5 + $0x48] sm:$0xff]
        %v334 = vld [vmem:[#allocation5 + $0x50] sm:$0xff]
        %v335 = vld [vmem:[#allocation5 + $0x58] sm:$0xff]
        %v336 = vld [vmem:[#allocation5 + $0x60] sm:$0xff]
        %v337 = vld [vmem:[#allocation5 + $0x68] sm:$0xff]
        %v338 = vld [vmem:[#allocation5 + $0x70] sm:$0xff]
        %v339 = vld [vmem:[#allocation5 + $0x78] sm:$0xff]
        %v340 = vld [vmem:[#allocation5 + $0x80] sm:$0xff]
        %v341 = vld [vmem:[#allocation5 + $0x88] sm:$0xff]
        %v342 = vld [vmem:[#allocation5 + $0x90] sm:$0xff]
        %v343 = vld [vmem:[#allocation5 + $0x98] sm:$0xff]
        %v344 = vld [vmem:[#allocation5 + $0xa0] sm:$0xff]
        %v345 = vld [vmem:[#allocation5 + $0xa8] sm:$0xff]
        %v346 = vld [vmem:[#allocation5 + $0xb0] sm:$0xff]
        %v347 = vld [vmem:[#allocation5 + $0xb8] sm:$0xff]
        %v348 = vld [vmem:[#allocation5 + $0xc0] sm:$0xff]
        %v349 = vld [vmem:[#allocation5 + $0xc8] sm:$0xff]
        %v350 = vld [vmem:[#allocation5 + $0xd0] sm:$0xff]
        %v351 = vld [vmem:[#allocation5 + $0xd8] sm:$0xff]
        %v352 = vld [vmem:[#allocation5 + $0xe0] sm:$0xff]
        %v353 = vld [vmem:[#allocation5 + $0xe8] sm:$0xff]
        %v354 = vld [vmem:[#allocation5 + $0xf0] sm:$0xff]
        %v355 = vld [vmem:[#allocation5 + $0xf8] sm:$0xff]
        %v356 = vld [vmem:[#allocation7] sm:$0x3]
        %v358 = vlaneseq
        %v359 = vshrl.u32 %v358, 7
        %v360 = vsub.s32 0, %v359
        %v361 = vrot.slane %v356, %v360
        %v362 = vlaneseq
        %v363 = vshrl.u32 %v362, 7
        %v364 = vsub.s32 1, %v363
        %v365 = vrot.slane %v356, %v364
        %368 = vmatprep.subr.mxu0 %v325
        %369 = vmatpush1.msra.mxu0 %v324
        %370 = vmatprep.subr.mxu0 %v327
        %371 = vmatpush1.msra.mxu0 %v326
        %372 = vmatprep.subr.mxu0 %v329
        %373 = vmatpush1.msra.mxu0 %v328
        %374 = vmatprep.subr.mxu0 %v331
        %375 = vmatpush1.msra.mxu0 %v330
        %376 = vmatprep.subr.mxu0 %v333
        %377 = vmatpush1.msra.mxu0 %v332
        %378 = vmatprep.subr.mxu0 %v335
        %379 = vmatpush1.msra.mxu0 %v334
        %380 = vmatprep.subr.mxu0 %v337
        %381 = vmatpush1.msra.mxu0 %v336
        %382 = vmatprep.subr.mxu0 %v339
        %383 = vmatpush1.msra.mxu0 %v338
        %384 = vmatprep.subr.mxu0 %v341
        %385 = vmatpush1.msra.mxu0 %v340
        %386 = vmatprep.subr.mxu0 %v343
        %387 = vmatpush1.msra.mxu0 %v342
        %388 = vmatprep.subr.mxu0 %v345
        %389 = vmatpush1.msra.mxu0 %v344
        %390 = vmatprep.subr.mxu0 %v347
        %391 = vmatpush1.msra.mxu0 %v346
        %392 = vmatprep.subr.mxu0 %v349
        %393 = vmatpush1.msra.mxu0 %v348
        %394 = vmatprep.subr.mxu0 %v351
        %395 = vmatpush1.msra.mxu0 %v350
        %396 = vmatprep.subr.mxu0 %v353
        %397 = vmatpush1.msra.mxu0 %v352
        %398 = vmatprep.subr.mxu0 %v355
        %399 = vmatpush1.msra.mxu0 %v354
        %400 = vmatprep.subr.mxu0 0.0
        %401 = vmatpush1.msra.mxu0 0.0
        %402 = vmatprep.subr.mxu0 0.0
        %403 = vmatpush1.msra.mxu0 0.0
        %404 = vmatprep.subr.mxu0 0.0
        %405 = vmatpush1.msra.mxu0 0.0
        %406 = vmatprep.subr.mxu0 0.0
        %407 = vmatpush1.msra.mxu0 0.0
        %408 = vmatprep.subr.mxu0 0.0
        %409 = vmatpush1.msra.mxu0 0.0
        %410 = vmatprep.subr.mxu0 0.0
        %411 = vmatpush1.msra.mxu0 0.0
        %412 = vmatprep.subr.mxu0 0.0
        %413 = vmatpush1.msra.mxu0 0.0
        %414 = vmatprep.subr.mxu0 0.0
        %415 = vmatpush1.msra.mxu0 0.0
        %416 = vmatprep.subr.mxu0 0.0
        %417 = vmatpush1.msra.mxu0 0.0
        %418 = vmatprep.subr.mxu0 0.0
        %419 = vmatpush1.msra.mxu0 0.0
        %420 = vmatprep.subr.mxu0 0.0
        %421 = vmatpush1.msra.mxu0 0.0
        %422 = vmatprep.subr.mxu0 0.0
        %423 = vmatpush1.msra.mxu0 0.0
        %424 = vmatprep.subr.mxu0 0.0
        %425 = vmatpush1.msra.mxu0 0.0
        %426 = vmatprep.subr.mxu0 0.0
        %427 = vmatpush1.msra.mxu0 0.0
        %428 = vmatprep.subr.mxu0 0.0
        %429 = vmatpush1.msra.mxu0 0.0
        %430 = vmatprep.subr.mxu0 0.0
        %431 = vmatpush1.msra.mxu0 0.0
        %432 = vmatprep.mubr.f32.mxu0 0.0
        %433 = vmatmul.mubr.f32.gmra.mrb[0].mxu0 %v299
        %v434 = vpop.f32.mrb[0].mxu0
        %v435 = vadd.f32 %v361, %v434
        %v436 = vpop.f32.mrb[0].mxu0
        %v437 = vadd.f32 %v365, %v436
        %438 = vmatprep.mubr.f32.mxu0 0.0
        %439 = vmatmul.mubr.f32.gmra.mrb[0].mxu0 %v300
        %v440 = vpop.f32.mrb[0].mxu0
        %v441 = vadd.f32 %v361, %v440
        %v442 = vpop.f32.mrb[0].mxu0
        %v443 = vadd.f32 %v365, %v442
        %444 = vmatprep.mubr.f32.mxu0 0.0
        %445 = vmatmul.mubr.f32.gmra.mrb[0].mxu0 %v301
        %v446 = vpop.f32.mrb[0].mxu0
        %v447 = vadd.f32 %v361, %v446
        %v448 = vpop.f32.mrb[0].mxu0
        %v449 = vadd.f32 %v365, %v448
        %450 = vmatprep.mubr.f32.mxu0 0.0
        %451 = vmatmul.mubr.f32.gmra.mrb[0].mxu0 %v302
        %v452 = vpop.f32.mrb[0].mxu0
        %v453 = vadd.f32 %v361, %v452
        %v454 = vpop.f32.mrb[0].mxu0
        %v455 = vadd.f32 %v365, %v454
        %456 = vmatprep.mubr.f32.mxu0 0.0
        %457 = vmatmul.mubr.f32.gmra.mrb[0].mxu0 %v303
        %v458 = vpop.f32.mrb[0].mxu0
        %v459 = vadd.f32 %v361, %v458
        %v460 = vpop.f32.mrb[0].mxu0
        %v461 = vadd.f32 %v365, %v460
        %462 = vmatprep.mubr.f32.mxu0 0.0
        %463 = vmatmul.mubr.f32.gmra.mrb[0].mxu0 %v304
        %v464 = vpop.f32.mrb[0].mxu0
        %v465 = vadd.f32 %v361, %v464
        %v466 = vpop.f32.mrb[0].mxu0
        %v467 = vadd.f32 %v365, %v466
        %468 = vmatprep.mubr.f32.mxu0 0.0
        %469 = vmatmul.mubr.f32.gmra.mrb[0].mxu0 %v305
        %v470 = vpop.f32.mrb[0].mxu0
        %v471 = vadd.f32 %v361, %v470
        %v472 = vpop.f32.mrb[0].mxu0
        %v473 = vadd.f32 %v365, %v472
        %474 = vmatprep.mubr.f32.mxu0 0.0
        %475 = vmatmul.mubr.f32.gmra.mrb[0].mxu0 %v306
        %v476 = vpop.f32.mrb[0].mxu0
        %v477 = vadd.f32 %v361, %v476
        %v478 = vpop.f32.mrb[0].mxu0
        %v479 = vadd.f32 %v365, %v478
        %480 = vmatprep.mubr.f32.mxu0 0.0
        %481 = vmatmul.mubr.f32.gmra.mrb[0].mxu0 %v307
        %v482 = vpop.f32.mrb[0].mxu0
        %v483 = vadd.f32 %v361, %v482
        %v484 = vpop.f32.mrb[0].mxu0
        %v485 = vadd.f32 %v365, %v484
        %486 = vmatprep.mubr.f32.mxu0 0.0
        %487 = vmatmul.mubr.f32.gmra.mrb[0].mxu0 %v308
        %v488 = vpop.f32.mrb[0].mxu0
        %v489 = vadd.f32 %v361, %v488
        %v490 = vpop.f32.mrb[0].mxu0
        %v491 = vadd.f32 %v365, %v490
        %492 = vmatprep.mubr.f32.mxu0 0.0
        %493 = vmatmul.mubr.f32.gmra.mrb[0].mxu0 %v309
        %v494 = vpop.f32.mrb[0].mxu0
        %v495 = vadd.f32 %v361, %v494
        %v496 = vpop.f32.mrb[0].mxu0
        %v497 = vadd.f32 %v365, %v496
        %498 = vmatprep.mubr.f32.mxu0 0.0
        %499 = vmatmul.mubr.f32.gmra.mrb[0].mxu0 %v310
        %v500 = vpop.f32.mrb[0].mxu0
        %v501 = vadd.f32 %v361, %v500
        %v502 = vpop.f32.mrb[0].mxu0
        %v503 = vadd.f32 %v365, %v502
        %504 = vmatprep.mubr.f32.mxu0 0.0
        %505 = vmatmul.mubr.f32.gmra.mrb[0].mxu0 %v311
        %v506 = vpop.f32.mrb[0].mxu0
        %v507 = vadd.f32 %v361, %v506
        %v508 = vpop.f32.mrb[0].mxu0
        %v509 = vadd.f32 %v365, %v508
        %510 = vmatprep.mubr.f32.mxu0 0.0
        %511 = vmatmul.mubr.f32.gmra.mrb[0].mxu0 %v312
        %v512 = vpop.f32.mrb[0].mxu0
        %v513 = vadd.f32 %v361, %v512
        %v514 = vpop.f32.mrb[0].mxu0
        %v515 = vadd.f32 %v365, %v514
        %516 = vmatprep.mubr.f32.mxu0 0.0
        %517 = vmatmul.mubr.f32.gmra.mrb[0].mxu0 %v313
        %v518 = vpop.f32.mrb[0].mxu0
        %v519 = vadd.f32 %v361, %v518
        %v520 = vpop.f32.mrb[0].mxu0
        %v521 = vadd.f32 %v365, %v520
        %522 = vmatprep.mubr.f32.mxu0 0.0
        %523 = vmatmul.mubr.f32.gmra.mrb[0].mxu0 %v314
        %v524 = vpop.f32.mrb[0].mxu0
        %v525 = vadd.f32 %v361, %v524
        %v526 = vpop.f32.mrb[0].mxu0
        %v527 = vadd.f32 %v365, %v526
        %528 = vmatprep.mubr.f32.mxu0 0.0
        %529 = vmatmul.mubr.f32.gmra.mrb[0].mxu0 %v315
        %v530 = vpop.f32.mrb[0].mxu0
        %v531 = vadd.f32 %v361, %v530
        %v532 = vpop.f32.mrb[0].mxu0
        %v533 = vadd.f32 %v365, %v532
        %534 = vmatprep.mubr.f32.mxu0 0.0
        %535 = vmatmul.mubr.f32.gmra.mrb[0].mxu0 %v316
        %v536 = vpop.f32.mrb[0].mxu0
        %v537 = vadd.f32 %v361, %v536
        %v538 = vpop.f32.mrb[0].mxu0
        %v539 = vadd.f32 %v365, %v538
        %540 = vmatprep.mubr.f32.mxu0 0.0
        %541 = vmatmul.mubr.f32.gmra.mrb[0].mxu0 %v317
        %v542 = vpop.f32.mrb[0].mxu0
        %v543 = vadd.f32 %v361, %v542
        %v544 = vpop.f32.mrb[0].mxu0
        %v545 = vadd.f32 %v365, %v544
        %546 = vmatprep.mubr.f32.mxu0 0.0
        %547 = vmatmul.mubr.f32.gmra.mrb[0].mxu0 %v318
        %v548 = vpop.f32.mrb[0].mxu0
        %v549 = vadd.f32 %v361, %v548
        %v550 = vpop.f32.mrb[0].mxu0
        %v551 = vadd.f32 %v365, %v550
        %552 = vmatprep.mubr.f32.mxu0 0.0
        %553 = vmatmul.mubr.f32.gmra.mrb[0].mxu0 %v319
        %v554 = vpop.f32.mrb[0].mxu0
        %v555 = vadd.f32 %v361, %v554
        %v556 = vpop.f32.mrb[0].mxu0
        %v557 = vadd.f32 %v365, %v556
        %558 = vmatprep.mubr.f32.mxu0 0.0
        %559 = vmatmul.mubr.f32.gmra.mrb[0].mxu0 %v320
        %v560 = vpop.f32.mrb[0].mxu0
        %v561 = vadd.f32 %v361, %v560
        %v562 = vpop.f32.mrb[0].mxu0
        %v563 = vadd.f32 %v365, %v562
        %564 = vmatprep.mubr.f32.mxu0 0.0
        %565 = vmatmul.mubr.f32.gmra.mrb[0].mxu0 %v321
        %v566 = vpop.f32.mrb[0].mxu0
        %v567 = vadd.f32 %v361, %v566
        %v568 = vpop.f32.mrb[0].mxu0
        %v569 = vadd.f32 %v365, %v568
        %570 = vmatprep.mubr.f32.mxu0 0.0
        %571 = vmatmul.mubr.f32.gmra.mrb[0].mxu0 %v322
        %v572 = vpop.f32.mrb[0].mxu0
        %v573 = vadd.f32 %v361, %v572
        %v574 = vpop.f32.mrb[0].mxu0
        %v575 = vadd.f32 %v365, %v574
        %576 = vmatprep.mubr.f32.mxu0 0.0
        %577 = vmatmul.mubr.f32.gmra.mrb[0].mxu0 %v323
        %v578 = vpop.f32.mrb[0].mxu0
        %v579 = vadd.f32 %v361, %v578
        %v580 = vpop.f32.mrb[0].mxu0
        %v581 = vadd.f32 %v365, %v580
        %582 = vdwg.mxu0
        %v583 = vmul.f32 %v435, 0.5
        %v584 = vmul.f32 %v437, 0.5
        %v585 = vmul.f32 %v441, 0.5
        %v586 = vmul.f32 %v443, 0.5
        %v587 = vmul.f32 %v447, 0.5
        %v588 = vmul.f32 %v449, 0.5
        %v589 = vmul.f32 %v453, 0.5
        %v590 = vmul.f32 %v455, 0.5
        %v591 = vmul.f32 %v459, 0.5
        %v592 = vmul.f32 %v461, 0.5
        %v593 = vmul.f32 %v465, 0.5
        %v594 = vmul.f32 %v467, 0.5
        %v595 = vmul.f32 %v471, 0.5
        %v596 = vmul.f32 %v473, 0.5
        %v597 = vmul.f32 %v477, 0.5
        %v598 = vmul.f32 %v479, 0.5
        %v599 = vmul.f32 %v483, 0.5
        %v600 = vmul.f32 %v485, 0.5
        %v601 = vmul.f32 %v489, 0.5
        %v602 = vmul.f32 %v491, 0.5
        %v603 = vmul.f32 %v495, 0.5
        %v604 = vmul.f32 %v497, 0.5
        %v605 = vmul.f32 %v501, 0.5
        %v606 = vmul.f32 %v503, 0.5
        %v607 = vmul.f32 %v507, 0.5
        %v608 = vmul.f32 %v509, 0.5
        %v609 = vmul.f32 %v513, 0.5
        %v610 = vmul.f32 %v515, 0.5
        %v611 = vmul.f32 %v519, 0.5
        %v612 = vmul.f32 %v521, 0.5
        %v613 = vmul.f32 %v525, 0.5
        %v614 = vmul.f32 %v527, 0.5
        %v615 = vmul.f32 %v531, 0.5
        %v616 = vmul.f32 %v533, 0.5
        %v617 = vmul.f32 %v537, 0.5
        %v618 = vmul.f32 %v539, 0.5
        %v619 = vmul.f32 %v543, 0.5
        %v620 = vmul.f32 %v545, 0.5
        %v621 = vmul.f32 %v549, 0.5
        %v622 = vmul.f32 %v551, 0.5
        %v623 = vmul.f32 %v555, 0.5
        %v624 = vmul.f32 %v557, 0.5
        %v625 = vmul.f32 %v561, 0.5
        %v626 = vmul.f32 %v563, 0.5
        %v627 = vmul.f32 %v567, 0.5
        %v628 = vmul.f32 %v569, 0.5
        %v629 = vmul.f32 %v573, 0.5
        %v630 = vmul.f32 %v575, 0.5
        %v631 = vmul.f32 %v579, 0.5
        %v632 = vmul.f32 %v581, 0.5
        %v633 = vmul.f32 %v435, 0.70710677
        %v634 = vmul.f32 %v437, 0.70710677
        %v635 = vmul.f32 %v441, 0.70710677
        %v636 = vmul.f32 %v443, 0.70710677
        %v637 = vmul.f32 %v447, 0.70710677
        %v638 = vmul.f32 %v449, 0.70710677
        %v639 = vmul.f32 %v453, 0.70710677
        %v640 = vmul.f32 %v455, 0.70710677
        %v641 = vmul.f32 %v459, 0.70710677
        %v642 = vmul.f32 %v461, 0.70710677
        %v643 = vmul.f32 %v465, 0.70710677
        %v644 = vmul.f32 %v467, 0.70710677
        %v645 = vmul.f32 %v471, 0.70710677
        %v646 = vmul.f32 %v473, 0.70710677
        %v647 = vmul.f32 %v477, 0.70710677
        %v648 = vmul.f32 %v479, 0.70710677
        %v649 = vmul.f32 %v483, 0.70710677
        %v650 = vmul.f32 %v485, 0.70710677
        %v651 = vmul.f32 %v489, 0.70710677
        %v652 = vmul.f32 %v491, 0.70710677
        %v653 = vmul.f32 %v495, 0.70710677
        %v654 = vmul.f32 %v497, 0.70710677
        %v655 = vmul.f32 %v501, 0.70710677
        %v656 = vmul.f32 %v503, 0.70710677
        %v657 = vmul.f32 %v507, 0.70710677
        %v658 = vmul.f32 %v509, 0.70710677
        %v659 = vmul.f32 %v513, 0.70710677
        %v660 = vmul.f32 %v515, 0.70710677
        %v661 = vmul.f32 %v519, 0.70710677
        %v662 = vmul.f32 %v521, 0.70710677
        %v663 = vmul.f32 %v525, 0.70710677
        %v664 = vmul.f32 %v527, 0.70710677
        %v665 = vmul.f32 %v531, 0.70710677
        %v666 = vmul.f32 %v533, 0.70710677
        %v667 = vmul.f32 %v537, 0.70710677
        %v668 = vmul.f32 %v539, 0.70710677
        %v669 = vmul.f32 %v543, 0.70710677
        %v670 = vmul.f32 %v545, 0.70710677
        %v671 = vmul.f32 %v549, 0.70710677
        %v672 = vmul.f32 %v551, 0.70710677
        %v673 = vmul.f32 %v555, 0.70710677
        %v674 = vmul.f32 %v557, 0.70710677
        %v675 = vmul.f32 %v561, 0.70710677
        %v676 = vmul.f32 %v563, 0.70710677
        %v677 = vmul.f32 %v567, 0.70710677
        %v678 = vmul.f32 %v569, 0.70710677
        %v679 = vmul.f32 %v573, 0.70710677
        %v680 = vmul.f32 %v575, 0.70710677
        %v681 = vmul.f32 %v579, 0.70710677
        %v682 = vmul.f32 %v581, 0.70710677
        %v683 = verf.f32.pop %v633
        %v684 = verf.f32.pop %v634
        %v685 = verf.f32.pop %v635
        %v686 = verf.f32.pop %v636
        %v687 = verf.f32.pop %v637
        %v688 = verf.f32.pop %v638
        %v689 = verf.f32.pop %v639
        %v690 = verf.f32.pop %v640
        %v691 = verf.f32.pop %v641
        %v692 = verf.f32.pop %v642
        %v693 = verf.f32.pop %v643
        %v694 = verf.f32.pop %v644
        %v695 = verf.f32.pop %v645
        %v696 = verf.f32.pop %v646
        %v697 = verf.f32.pop %v647
        %v698 = verf.f32.pop %v648
        %v699 = verf.f32.pop %v649
        %v700 = verf.f32.pop %v650
        %v701 = verf.f32.pop %v651
        %v702 = verf.f32.pop %v652
        %v703 = verf.f32.pop %v653
        %v704 = verf.f32.pop %v654
        %v705 = verf.f32.pop %v655
        %v706 = verf.f32.pop %v656
        %v707 = verf.f32.pop %v657
        %v708 = verf.f32.pop %v658
        %v709 = verf.f32.pop %v659
        %v710 = verf.f32.pop %v660
        %v711 = verf.f32.pop %v661
        %v712 = verf.f32.pop %v662
        %v713 = verf.f32.pop %v663
        %v714 = verf.f32.pop %v664
        %v715 = verf.f32.pop %v665
        %v716 = verf.f32.pop %v666
        %v717 = verf.f32.pop %v667
        %v718 = verf.f32.pop %v668
        %v719 = verf.f32.pop %v669
        %v720 = verf.f32.pop %v670
        %v721 = verf.f32.pop %v671
        %v722 = verf.f32.pop %v672
        %v723 = verf.f32.pop %v673
        %v724 = verf.f32.pop %v674
        %v725 = verf.f32.pop %v675
        %v726 = verf.f32.pop %v676
        %v727 = verf.f32.pop %v677
        %v728 = verf.f32.pop %v678
        %v729 = verf.f32.pop %v679
        %v730 = verf.f32.pop %v680
        %v731 = verf.f32.pop %v681
        %v732 = verf.f32.pop %v682
        %v733 = vadd.f32 %v683, 1.0
        %v734 = vadd.f32 %v684, 1.0
        %v735 = vadd.f32 %v685, 1.0
        %v736 = vadd.f32 %v686, 1.0
        %v737 = vadd.f32 %v687, 1.0
        %v738 = vadd.f32 %v688, 1.0
        %v739 = vadd.f32 %v689, 1.0
        %v740 = vadd.f32 %v690, 1.0
        %v741 = vadd.f32 %v691, 1.0
        %v742 = vadd.f32 %v692, 1.0
        %v743 = vadd.f32 %v693, 1.0
        %v744 = vadd.f32 %v694, 1.0
        %v745 = vadd.f32 %v695, 1.0
        %v746 = vadd.f32 %v696, 1.0
        %v747 = vadd.f32 %v697, 1.0
        %v748 = vadd.f32 %v698, 1.0
        %v749 = vadd.f32 %v699, 1.0
        %v750 = vadd.f32 %v700, 1.0
        %v751 = vadd.f32 %v701, 1.0
        %v752 = vadd.f32 %v702, 1.0
        %v753 = vadd.f32 %v703, 1.0
        %v754 = vadd.f32 %v704, 1.0
        %v755 = vadd.f32 %v705, 1.0
        %v756 = vadd.f32 %v706, 1.0
        %v757 = vadd.f32 %v707, 1.0
        %v758 = vadd.f32 %v708, 1.0
        %v759 = vadd.f32 %v709, 1.0
        %v760 = vadd.f32 %v710, 1.0
        %v761 = vadd.f32 %v711, 1.0
        %v762 = vadd.f32 %v712, 1.0
        %v763 = vadd.f32 %v713, 1.0
        %v764 = vadd.f32 %v714, 1.0
        %v765 = vadd.f32 %v715, 1.0
        %v766 = vadd.f32 %v716, 1.0
        %v767 = vadd.f32 %v717, 1.0
        %v768 = vadd.f32 %v718, 1.0
        %v769 = vadd.f32 %v719, 1.0
        %v770 = vadd.f32 %v720, 1.0
        %v771 = vadd.f32 %v721, 1.0
        %v772 = vadd.f32 %v722, 1.0
        %v773 = vadd.f32 %v723, 1.0
        %v774 = vadd.f32 %v724, 1.0
        %v775 = vadd.f32 %v725, 1.0
        %v776 = vadd.f32 %v726, 1.0
        %v777 = vadd.f32 %v727, 1.0
        %v778 = vadd.f32 %v728, 1.0
        %v779 = vadd.f32 %v729, 1.0
        %v780 = vadd.f32 %v730, 1.0
        %v781 = vadd.f32 %v731, 1.0
        %v782 = vadd.f32 %v732, 1.0
        %v783 = vmul.f32 %v583, %v733
        %v784 = vmul.f32 %v584, %v734
        %v785 = vmul.f32 %v585, %v735
        %v786 = vmul.f32 %v586, %v736
        %v787 = vmul.f32 %v587, %v737
        %v788 = vmul.f32 %v588, %v738
        %v789 = vmul.f32 %v589, %v739
        %v790 = vmul.f32 %v590, %v740
        %v791 = vmul.f32 %v591, %v741
        %v792 = vmul.f32 %v592, %v742
        %v793 = vmul.f32 %v593, %v743
        %v794 = vmul.f32 %v594, %v744
        %v795 = vmul.f32 %v595, %v745
        %v796 = vmul.f32 %v596, %v746
        %v797 = vmul.f32 %v597, %v747
        %v798 = vmul.f32 %v598, %v748
        %v799 = vmul.f32 %v599, %v749
        %v800 = vmul.f32 %v600, %v750
        %v801 = vmul.f32 %v601, %v751
        %v802 = vmul.f32 %v602, %v752
        %v803 = vmul.f32 %v603, %v753
        %v804 = vmul.f32 %v604, %v754
        %v805 = vmul.f32 %v605, %v755
        %v806 = vmul.f32 %v606, %v756
        %v807 = vmul.f32 %v607, %v757
        %v808 = vmul.f32 %v608, %v758
        %v809 = vmul.f32 %v609, %v759
        %v810 = vmul.f32 %v610, %v760
        %v811 = vmul.f32 %v611, %v761
        %v812 = vmul.f32 %v612, %v762
        %v813 = vmul.f32 %v613, %v763
        %v814 = vmul.f32 %v614, %v764
        %v815 = vmul.f32 %v615, %v765
        %v816 = vmul.f32 %v616, %v766
        %v817 = vmul.f32 %v617, %v767
        %v818 = vmul.f32 %v618, %v768
        %v819 = vmul.f32 %v619, %v769
        %v820 = vmul.f32 %v620, %v770
        %v821 = vmul.f32 %v621, %v771
        %v822 = vmul.f32 %v622, %v772
        %v823 = vmul.f32 %v623, %v773
        %v824 = vmul.f32 %v624, %v774
        %v825 = vmul.f32 %v625, %v775
        %v826 = vmul.f32 %v626, %v776
        %v827 = vmul.f32 %v627, %v777
        %v828 = vmul.f32 %v628, %v778
        %v829 = vmul.f32 %v629, %v779
        %v830 = vmul.f32 %v630, %v780
        %v831 = vmul.f32 %v631, %v781
        %v832 = vmul.f32 %v632, %v782
        %v833 = vld [vmem:[#allocation8] sm:$0xff]
        %v834 = vld [vmem:[#allocation8 + $0x8] sm:$0xff]
        %v835 = vld [vmem:[#allocation8 + $0x10] sm:$0xff]
        %v836 = vld [vmem:[#allocation8 + $0x18] sm:$0xff]
        %v837 = vld [vmem:[#allocation8 + $0x20] sm:$0xff]
        %v838 = vld [vmem:[#allocation8 + $0x28] sm:$0xff]
        %v839 = vld [vmem:[#allocation8 + $0x30] sm:$0xff]
        %v840 = vld [vmem:[#allocation8 + $0x38] sm:$0xff]
        %v841 = vld [vmem:[#allocation8 + $0x40] sm:$0xff]
        %v842 = vld [vmem:[#allocation8 + $0x48] sm:$0xff]
        %v843 = vld [vmem:[#allocation8 + $0x50] sm:$0xff]
        %v844 = vld [vmem:[#allocation8 + $0x58] sm:$0xff]
        %v845 = vld [vmem:[#allocation8 + $0x60] sm:$0xff]
        %v846 = vld [vmem:[#allocation8 + $0x68] sm:$0xff]
        %v847 = vld [vmem:[#allocation8 + $0x70] sm:$0xff]
        %v848 = vld [vmem:[#allocation8 + $0x78] sm:$0xff]
        %v849 = vld [vmem:[#allocation8 + $0x80] sm:$0xff]
        %v850 = vld [vmem:[#allocation8 + $0x88] sm:$0xff]
        %v851 = vld [vmem:[#allocation8 + $0x90] sm:$0xff]
        %v852 = vld [vmem:[#allocation8 + $0x98] sm:$0xff]
        %v853 = vld [vmem:[#allocation8 + $0xa0] sm:$0xff]
        %v854 = vld [vmem:[#allocation8 + $0xa8] sm:$0xff]
        %v855 = vld [vmem:[#allocation8 + $0xb0] sm:$0xff]
        %v856 = vld [vmem:[#allocation8 + $0xb8] sm:$0xff]
        %v857 = vld [vmem:[#allocation8 + $0xc0] sm:$0xff]
        %v858 = vld [vmem:[#allocation8 + $0xc8] sm:$0xff]
        %v859 = vld [vmem:[#allocation8 + $0xd0] sm:$0xff]
        %v860 = vld [vmem:[#allocation8 + $0xd8] sm:$0xff]
        %v861 = vld [vmem:[#allocation8 + $0xe0] sm:$0xff]
        %v862 = vld [vmem:[#allocation8 + $0xe8] sm:$0xff]
        %v863 = vld [vmem:[#allocation8 + $0xf0] sm:$0xff]
        %v864 = vld [vmem:[#allocation8 + $0xf8] sm:$0xff]
        %v865 = vld [vmem:[#allocation10] sm:$0x1]
        %v867 = vlaneseq
        %v868 = vshrl.u32 %v867, 7
        %v869 = vsub.s32 0, %v868
        %v870 = vrot.slane %v865, %v869
        %872 = vmatprep.subr.mxu0 0.0
        %873 = vmatpush1.msra.mxu0 %v833
        %874 = vmatprep.subr.mxu0 0.0
        %875 = vmatpush1.msra.mxu0 %v834
        %876 = vmatprep.subr.mxu0 0.0
        %877 = vmatpush1.msra.mxu0 %v835
        %878 = vmatprep.subr.mxu0 0.0
        %879 = vmatpush1.msra.mxu0 %v836
        %880 = vmatprep.subr.mxu0 0.0
        %881 = vmatpush1.msra.mxu0 %v837
        %882 = vmatprep.subr.mxu0 0.0
        %883 = vmatpush1.msra.mxu0 %v838
        %884 = vmatprep.subr.mxu0 0.0
        %885 = vmatpush1.msra.mxu0 %v839
        %886 = vmatprep.subr.mxu0 0.0
        %887 = vmatpush1.msra.mxu0 %v840
        %888 = vmatprep.subr.mxu0 0.0
        %889 = vmatpush1.msra.mxu0 %v841
        %890 = vmatprep.subr.mxu0 0.0
        %891 = vmatpush1.msra.mxu0 %v842
        %892 = vmatprep.subr.mxu0 0.0
        %893 = vmatpush1.msra.mxu0 %v843
        %894 = vmatprep.subr.mxu0 0.0
        %895 = vmatpush1.msra.mxu0 %v844
        %896 = vmatprep.subr.mxu0 0.0
        %897 = vmatpush1.msra.mxu0 %v845
        %898 = vmatprep.subr.mxu0 0.0
        %899 = vmatpush1.msra.mxu0 %v846
        %900 = vmatprep.subr.mxu0 0.0
        %901 = vmatpush1.msra.mxu0 %v847
        %902 = vmatprep.subr.mxu0 0.0
        %903 = vmatpush1.msra.mxu0 %v848
        %904 = vmatprep.subr.mxu0 0.0
        %905 = vmatpush1.msra.mxu0 %v849
        %906 = vmatprep.subr.mxu0 0.0
        %907 = vmatpush1.msra.mxu0 %v850
        %908 = vmatprep.subr.mxu0 0.0
        %909 = vmatpush1.msra.mxu0 %v851
        %910 = vmatprep.subr.mxu0 0.0
        %911 = vmatpush1.msra.mxu0 %v852
        %912 = vmatprep.subr.mxu0 0.0
        %913 = vmatpush1.msra.mxu0 %v853
        %914 = vmatprep.subr.mxu0 0.0
        %915 = vmatpush1.msra.mxu0 %v854
        %916 = vmatprep.subr.mxu0 0.0
        %917 = vmatpush1.msra.mxu0 %v855
        %918 = vmatprep.subr.mxu0 0.0
        %919 = vmatpush1.msra.mxu0 %v856
        %920 = vmatprep.subr.mxu0 0.0
        %921 = vmatpush1.msra.mxu0 %v857
        %922 = vmatprep.subr.mxu0 0.0
        %923 = vmatpush1.msra.mxu0 %v858
        %924 = vmatprep.subr.mxu0 0.0
        %925 = vmatpush1.msra.mxu0 %v859
        %926 = vmatprep.subr.mxu0 0.0
        %927 = vmatpush1.msra.mxu0 %v860
        %928 = vmatprep.subr.mxu0 0.0
        %929 = vmatpush1.msra.mxu0 %v861
        %930 = vmatprep.subr.mxu0 0.0
        %931 = vmatpush1.msra.mxu0 %v862
        %932 = vmatprep.subr.mxu0 0.0
        %933 = vmatpush1.msra.mxu0 %v863
        %934 = vmatprep.subr.mxu0 0.0
        %935 = vmatpush1.msra.mxu0 %v864
        %936 = vmatprep.mubr.f32.mxu0 %v784
        %937 = vmatmul.mubr.f32.gmra.mrb[0].mxu0 %v783
        %v938 = vpop.f32.mrb[0].mxu0
        %v939 = vadd.f32 %v870, %v938
        %v940 = vpop.f32.mrb[0].mxu0
        %941 = vmatprep.mubr.f32.mxu0 %v786
        %942 = vmatmul.mubr.f32.gmra.mrb[0].mxu0 %v785
        %v943 = vpop.f32.mrb[0].mxu0
        %v944 = vadd.f32 %v870, %v943
        %v945 = vpop.f32.mrb[0].mxu0
        %946 = vmatprep.mubr.f32.mxu0 %v788
        %947 = vmatmul.mubr.f32.gmra.mrb[0].mxu0 %v787
        %v948 = vpop.f32.mrb[0].mxu0
        %v949 = vadd.f32 %v870, %v948
        %v950 = vpop.f32.mrb[0].mxu0
        %951 = vmatprep.mubr.f32.mxu0 %v790
        %952 = vmatmul.mubr.f32.gmra.mrb[0].mxu0 %v789
        %v953 = vpop.f32.mrb[0].mxu0
        %v954 = vadd.f32 %v870, %v953
        %v955 = vpop.f32.mrb[0].mxu0
        %956 = vmatprep.mubr.f32.mxu0 %v792
        %957 = vmatmul.mubr.f32.gmra.mrb[0].mxu0 %v791
        %v958 = vpop.f32.mrb[0].mxu0
        %v959 = vadd.f32 %v870, %v958
        %v960 = vpop.f32.mrb[0].mxu0
        %961 = vmatprep.mubr.f32.mxu0 %v794
        %962 = vmatmul.mubr.f32.gmra.mrb[0].mxu0 %v793
        %v963 = vpop.f32.mrb[0].mxu0
        %v964 = vadd.f32 %v870, %v963
        %v965 = vpop.f32.mrb[0].mxu0
        %966 = vmatprep.mubr.f32.mxu0 %v796
        %967 = vmatmul.mubr.f32.gmra.mrb[0].mxu0 %v795
        %v968 = vpop.f32.mrb[0].mxu0
        %v969 = vadd.f32 %v870, %v968
        %v970 = vpop.f32.mrb[0].mxu0
        %971 = vmatprep.mubr.f32.mxu0 %v798
        %972 = vmatmul.mubr.f32.gmra.mrb[0].mxu0 %v797
        %v973 = vpop.f32.mrb[0].mxu0
        %v974 = vadd.f32 %v870, %v973
        %v975 = vpop.f32.mrb[0].mxu0
        %976 = vmatprep.mubr.f32.mxu0 %v800
        %977 = vmatmul.mubr.f32.gmra.mrb[0].mxu0 %v799
        %v978 = vpop.f32.mrb[0].mxu0
        %v979 = vadd.f32 %v870, %v978
        %v980 = vpop.f32.mrb[0].mxu0
        %981 = vmatprep.mubr.f32.mxu0 %v802
        %982 = vmatmul.mubr.f32.gmra.mrb[0].mxu0 %v801
        %v983 = vpop.f32.mrb[0].mxu0
        %v984 = vadd.f32 %v870, %v983
        %v985 = vpop.f32.mrb[0].mxu0
        %986 = vmatprep.mubr.f32.mxu0 %v804
        %987 = vmatmul.mubr.f32.gmra.mrb[0].mxu0 %v803
        %v988 = vpop.f32.mrb[0].mxu0
        %v989 = vadd.f32 %v870, %v988
        %v990 = vpop.f32.mrb[0].mxu0
        %991 = vmatprep.mubr.f32.mxu0 %v806
        %992 = vmatmul.mubr.f32.gmra.mrb[0].mxu0 %v805
        %v993 = vpop.f32.mrb[0].mxu0
        %v994 = vadd.f32 %v870, %v993
        %v995 = vpop.f32.mrb[0].mxu0
        %996 = vmatprep.mubr.f32.mxu0 %v808
        %997 = vmatmul.mubr.f32.gmra.mrb[0].mxu0 %v807
        %v998 = vpop.f32.mrb[0].mxu0
        %v999 = vadd.f32 %v870, %v998
        %v1000 = vpop.f32.mrb[0].mxu0
        %1001 = vmatprep.mubr.f32.mxu0 %v810
        %1002 = vmatmul.mubr.f32.gmra.mrb[0].mxu0 %v809
        %v1003 = vpop.f32.mrb[0].mxu0
        %v1004 = vadd.f32 %v870, %v1003
        %v1005 = vpop.f32.mrb[0].mxu0
        %1006 = vmatprep.mubr.f32.mxu0 %v812
        %1007 = vmatmul.mubr.f32.gmra.mrb[0].mxu0 %v811
        %v1008 = vpop.f32.mrb[0].mxu0
        %v1009 = vadd.f32 %v870, %v1008
        %v1010 = vpop.f32.mrb[0].mxu0
        %1011 = vmatprep.mubr.f32.mxu0 %v814
        %1012 = vmatmul.mubr.f32.gmra.mrb[0].mxu0 %v813
        %v1013 = vpop.f32.mrb[0].mxu0
        %v1014 = vadd.f32 %v870, %v1013
        %v1015 = vpop.f32.mrb[0].mxu0
        %1016 = vmatprep.mubr.f32.mxu0 %v816
        %1017 = vmatmul.mubr.f32.gmra.mrb[0].mxu0 %v815
        %v1018 = vpop.f32.mrb[0].mxu0
        %v1019 = vadd.f32 %v870, %v1018
        %v1020 = vpop.f32.mrb[0].mxu0
        %1021 = vmatprep.mubr.f32.mxu0 %v818
        %1022 = vmatmul.mubr.f32.gmra.mrb[0].mxu0 %v817
        %v1023 = vpop.f32.mrb[0].mxu0
        %v1024 = vadd.f32 %v870, %v1023
        %v1025 = vpop.f32.mrb[0].mxu0
        %1026 = vmatprep.mubr.f32.mxu0 %v820
        %1027 = vmatmul.mubr.f32.gmra.mrb[0].mxu0 %v819
        %v1028 = vpop.f32.mrb[0].mxu0
        %v1029 = vadd.f32 %v870, %v1028
        %v1030 = vpop.f32.mrb[0].mxu0
        %1031 = vmatprep.mubr.f32.mxu0 %v822
        %1032 = vmatmul.mubr.f32.gmra.mrb[0].mxu0 %v821
        %v1033 = vpop.f32.mrb[0].mxu0
        %v1034 = vadd.f32 %v870, %v1033
        %v1035 = vpop.f32.mrb[0].mxu0
        %1036 = vmatprep.mubr.f32.mxu0 %v824
        %1037 = vmatmul.mubr.f32.gmra.mrb[0].mxu0 %v823
        %v1038 = vpop.f32.mrb[0].mxu0
        %v1039 = vadd.f32 %v870, %v1038
        %v1040 = vpop.f32.mrb[0].mxu0
        %1041 = vmatprep.mubr.f32.mxu0 %v826
        %1042 = vmatmul.mubr.f32.gmra.mrb[0].mxu0 %v825
        %v1043 = vpop.f32.mrb[0].mxu0
        %v1044 = vadd.f32 %v870, %v1043
        %v1045 = vpop.f32.mrb[0].mxu0
        %1046 = vmatprep.mubr.f32.mxu0 %v828
        %1047 = vmatmul.mubr.f32.gmra.mrb[0].mxu0 %v827
        %v1048 = vpop.f32.mrb[0].mxu0
        %v1049 = vadd.f32 %v870, %v1048
        %v1050 = vpop.f32.mrb[0].mxu0
        %1051 = vmatprep.mubr.f32.mxu0 %v830
        %1052 = vmatmul.mubr.f32.gmra.mrb[0].mxu0 %v829
        %v1053 = vpop.f32.mrb[0].mxu0
        %v1054 = vadd.f32 %v870, %v1053
        %v1055 = vpop.f32.mrb[0].mxu0
        %1056 = vmatprep.mubr.f32.mxu0 %v832
        %1057 = vmatmul.mubr.f32.gmra.mrb[0].mxu0 %v831
        %v1058 = vpop.f32.mrb[0].mxu0
        %v1059 = vadd.f32 %v870, %v1058
        %v1060 = vpop.f32.mrb[0].mxu0
        %1061 = vdwg.mxu0
        %1062 = vst [vmem:[%s296] sm:$0xff] %v939
        %1063 = vst [vmem:[%s296 + $0x8] sm:$0xff] %v944
        %1064 = vst [vmem:[%s296 + $0x10] sm:$0xff] %v949
        %1065 = vst [vmem:[%s296 + $0x18] sm:$0xff] %v954
        %1066 = vst [vmem:[%s296 + $0x20] sm:$0xff] %v959
        %1067 = vst [vmem:[%s296 + $0x28] sm:$0xff] %v964
        %1068 = vst [vmem:[%s296 + $0x30] sm:$0xff] %v969
        %1069 = vst [vmem:[%s296 + $0x38] sm:$0xff] %v974
        %1070 = vst [vmem:[%s296 + $0x40] sm:$0xff] %v979
        %1071 = vst [vmem:[%s296 + $0x48] sm:$0xff] %v984
        %1072 = vst [vmem:[%s296 + $0x50] sm:$0xff] %v989
        %1073 = vst [vmem:[%s296 + $0x58] sm:$0xff] %v994
        %1074 = vst [vmem:[%s296 + $0x60] sm:$0xff] %v999
        %1075 = vst [vmem:[%s296 + $0x68] sm:$0xff] %v1004
        %1076 = vst [vmem:[%s296 + $0x70] sm:$0xff] %v1009
        %1077 = vst [vmem:[%s296 + $0x78] sm:$0xff] %v1014
        %1078 = vst [vmem:[%s296 + $0x80] sm:$0xff] %v1019
        %1079 = vst [vmem:[%s296 + $0x88] sm:$0xff] %v1024
        %1080 = vst [vmem:[%s296 + $0x90] sm:$0xff] %v1029
        %1081 = vst [vmem:[%s296 + $0x98] sm:$0xff] %v1034
        %1082 = vst [vmem:[%s296 + $0xa0] sm:$0xff] %v1039
        %1083 = vst [vmem:[%s296 + $0xa8] sm:$0xff] %v1044
        %1084 = vst [vmem:[%s296 + $0xb0] sm:$0xff] %v1049
        %1085 = vst [vmem:[%s296 + $0xb8] sm:$0xff] %v1054
        %1086 = vst [vmem:[%s296 + $0xc0] sm:$0xff] %v1059
        %s1087 = sand.u32 %s142, 1
        %s1088 = scalar_lea.sflag [#allocation4], %s1087
        %s1089 = sand.u32 %s142, 1
        %s1090 = smul.addr %s1089, 200
        %s1091 = scalar_lea.vmem [#allocation11], %s1090
        // Predicated region
        $region61: #{_mlp_forward.1} parent=39 // pred_check
          %p1092 = pneg %p152
        $region62: #{_mlp_forward.1} parent=39 // pred_check_branch
          %1094 = sbr.rel (%p1092) target = $region64
        $region63: #{_mlp_forward.1} parent=39 // pred_region
          %s1095 = smul.u32 25, %s24
          %s1097 = ssub.s32 3200, 3200
          %1098 = vsyncadd %s1088, %s1097
          %s1099 = smul.addr %s1095, 128
          %s1100 = scalar_lea.hbm %s5, %s1099
          %s1101 = sshll.u32 %s1091, 4
          %s1102 = int_to_ptr.vmem [resolvable:$true] %s1101
          %1107 = dma.vmem_to_hbm [thread:$0]  %s1102, 3200, %s1100, %s1088, 128, 128, 8
        $region64: #{_mlp_forward.1} parent=39 // pred_fallthru
          _
      $region40: #{_mlp_forward.1} parent=5 // pred_fallthru
        _
      %p1108 = scmp.le.s32.totalorder 2, %s19
      // Predicated region
      $region65: #{_mlp_forward.1} parent=5 // pred_check
        %p1109 = pneg %p1108
      $region66: #{_mlp_forward.1} parent=5 // pred_check_branch
        %1111 = sbr.rel (%p1109) target = $region68
      $region67: #{_mlp_forward.1} parent=5 // pred_region
        %s1112 = ssub.s32 %s19, 2
        // Predicated region
        $region69: #{_mlp_forward.1} parent=67 // pred_check
          %p1113 = pneg %p158
        $region70: #{_mlp_forward.1} parent=67 // pred_check_branch
          %1115 = sbr.rel (%p1113) target = $region72
        $region71: #{_mlp_forward.1} parent=67 // pred_region
          %s1116 = sand.u32 %s143, 1
          %s1117 = scalar_lea.sflag [#allocation4], %s1116
          %s1118 = sand.u32 %s143, 1
          %s1119 = smul.addr %s1118, 200
          %s1120 = scalar_lea.vmem [#allocation11], %s1119
          %1121 = dma.done %s1117, 3200
        $region72: #{_mlp_forward.1} parent=67 // pred_fallthru
          _
      $region68: #{_mlp_forward.1} parent=5 // pred_fallthru
        _
    $region6: #{_mlp_forward.1} parent=1 // loop_footer
      %s23 = sadd.s32 1, %s19
    $region7: #{_mlp_forward.1} parent=1 // loop_footer_branch
      %18 = sbr.rel target = $region3
    $region8: #{_mlp_forward.1} parent=1 // loop_exit
      _
    %1122 = vsyncpa [#allocation3], 1
    %s1123 = scalar_lea.sflag [#allocation3], 1
    %1124 = vsyncpa %s1123, 1
    %1125 = vsyncpa [#allocation6], 1
    %1126 = vsyncpa [#allocation9], 1
    %1127 = vsyncpa [#allocation4], 1
    %s1128 = scalar_lea.sflag [#allocation4], 1
    %1129 = vsyncpa %s1128, 1

</llo_original>
